<compile_context>
chip_gen: v5e
topology: v5e:2x2
jax: 0.10.0
libtpu: 0.0.40
codegen_flags: <defaults>
</compile_context>

<pallas_src>
import functools
import math

import jax
import jax.numpy as jnp
from jax.experimental import pallas as pl
from jax.experimental.pallas import tpu as pltpu


_LANE = 128


def _round_up(x, m):
    return (x + m - 1) // m * m


def _choose_tile(n, target):
    """Largest multiple of 128 <= target that divides n (n is a 128-multiple)."""
    t = min(target, n)
    t -= t % _LANE
    t = max(t, _LANE)
    while n % t:
        t -= _LANE
    return t


def _vmem_limit_bytes():
    # 3/4 of physical VMEM, capped at 96 MiB: 96 MiB on v5e/v6e (128 MiB phys),
    # 48 MiB on v7x (64 MiB phys).  Fallback assumes the smaller v7x budget.
    cap = 64 * 1024 * 1024
    try:
        info = pltpu.get_tpu_info()
        cap = getattr(info, "vmem_capacity_bytes", None) or cap
    except Exception:
        pass
    return int(min(96 * 1024 * 1024, (cap * 3) // 4))


# ------------------------------------------------------------------ kernel ---

def _gcnii_layer_kernel(kidx_ref, kcnt_ref, a_ref, feat_ref, feat0_ref, *rest,
                        beta, residual):
    if residual:
        res_ref, w_ref, o_ref, acc_ref = rest
    else:
        w_ref, o_ref, acc_ref = rest

    i = pl.program_id(0)
    k = pl.program_id(1)

    @pl.when(k == 0)
    def _():
        acc_ref[...] = jnp.zeros_like(acc_ref)

    # Only non-empty A_hat blocks contribute.  For k >= kcnt the index_map
    # repeats the previous block index, so the pipeline skips the DMA and we
    # skip the MXU work here.
    @pl.when(k < kcnt_ref[i])
    def _():
        acc_ref[...] += jnp.dot(a_ref[...], feat_ref[...],
                                preferred_element_type=jnp.float32)

    @pl.when(k == pl.num_programs(1) - 1)
    def _():
        # acc holds (1-alpha) * A_hat @ feat ; feat0_ref holds alpha * feat_0.
        feat_sum = acc_ref[...] + feat0_ref[...]
        # w_ref holds beta * W pre-cast to bf16; mix and accumulate in f32.
        rst = (1.0 - beta) * feat_sum + jnp.dot(
            feat_sum.astype(jnp.bfloat16), w_ref[...],
            preferred_element_type=jnp.float32)
        if residual:
            rst = rst + res_ref[...]
        o_ref[...] = rst.astype(o_ref.dtype)


# ----------------------------------------------------------------- wrapper ---

@functools.partial(jax.jit,
                   static_argnames=("alpha", "lamda", "layer", "residual",
                                    "tm_target", "tk_target"))
def gcnii_layer_forward(adj, feat, feat_0, weight, alpha, lamda, layer,
                        residual=False, tm_target=512, tk_target=1024):
    """GCNIILayer.forward.  adj[d, s] = 1 iff edge s -> d (dense adjacency)."""
    # TODO(synk): the DGL zero-in-degree validation error (host-side raise) is
    #             not reproduced; degrees are clamped to >= 1 as in the spec.
    n, f = feat.shape
    beta = math.log(lamda / layer + 1.0)

    # --- one-time preprocessing (fused by XLA) -----------------------------
    degs = jnp.maximum(jnp.sum(adj.astype(jnp.float32), axis=1, keepdims=True), 1.0)
    norm = jax.lax.rsqrt(degs)                                   # (N, 1)
    # Fold D^-1/2 .. D^-1/2 and (1 - alpha) into the adjacency once.
    a_hat = (norm * (1.0 - alpha)) * adj * norm.T

    # Lane/tile-friendly zero padding (semantically inert: padded rows/cols of
    # A_hat, feat, feat_0 and W are zero, so padded outputs are zero).
    base = 256 if n <= 2048 else 512
    n_pad = _round_up(n, base)
    f_pad = _round_up(f, _LANE)
    tm = _choose_tile(n_pad, tm_target)
    tk = _choose_tile(n_pad, tk_target)
    # Keep >= 2 blocks on the "parallel" row axis so both v7x TCs get work.
    tm = min(tm, max(_LANE, n_pad // 2))
    num_i, num_k = n_pad // tm, n_pad // tk

    a_pad = jnp.pad(a_hat.astype(jnp.bfloat16),
                    ((0, n_pad - n), (0, n_pad - n)))             # bf16 A_hat'
    feat_b = jnp.pad(feat, ((0, n_pad - n), (0, f_pad - f))).astype(jnp.bfloat16)
    feat0s = jnp.pad(feat_0.astype(jnp.float32) * alpha,
                     ((0, n_pad - n), (0, f_pad - f)))            # f32, alpha folded
    w_beta = jnp.pad(weight.astype(jnp.float32) * beta,
                     ((0, f_pad - f), (0, f_pad - f))).astype(jnp.bfloat16)

    # --- block-sparsity metadata for scalar prefetch -----------------------
    # Per row tile: ascending list of k-tiles with any nonzero, padded by
    # repeating the last valid index (so Pallas skips the redundant DMAs), and
    # the count used in-kernel to skip the matmul for empty blocks.
    blk = jnp.any(a_pad.reshape(num_i, tm, num_k, tk) != 0, axis=(1, 3))
    kar = jnp.arange(num_k, dtype=jnp.int32)[None, :]
    order = jnp.argsort(jnp.where(blk, kar, kar + num_k), axis=1).astype(jnp.int32)
    kcnt = jnp.sum(blk, axis=1).astype(jnp.int32)                       # (num_i,)
    clamped = jnp.minimum(kar, jnp.maximum(kcnt[:, None] - 1, 0))
    kidx = jnp.take_along_axis(order, clamped, axis=1).reshape(-1)      # (num_i*num_k,)
    kidx = kidx.astype(jnp.int32)

    in_specs = [
        pl.BlockSpec((tm, tk),                       # A_hat' tile (bf16)
                     lambda i, k, ki, kc: (i, ki[i * num_k + k])),
        pl.BlockSpec((tk, f_pad),                    # feat tile (bf16, src rows)
                     lambda i, k, ki, kc: (ki[i * num_k + k], 0)),
        pl.BlockSpec((tm, f_pad),                    # alpha*feat_0 (f32, resident over k)
                     lambda i, k, ki, kc: (i, 0)),
    ]
    operands = [kidx, kcnt, a_pad, feat_b, feat0s]
    if residual:
        res_pad = jnp.pad(feat.astype(jnp.float32),
                          ((0, n_pad - n), (0, f_pad - f)))
        in_specs.append(pl.BlockSpec((tm, f_pad),    # residual feat (f32, dst rows)
                                     lambda i, k, ki, kc: (i, 0)))
        operands.append(res_pad)
    in_specs.append(pl.BlockSpec((f_pad, f_pad),     # beta*W (bf16, resident)
                                 lambda i, k, ki, kc: (0, 0)))
    operands.append(w_beta)

    # For multi-layer stacks, switch out dtype to bf16 to stream inter-layer
    # features in bf16 end-to-end; f32 here since this is the final output.
    out = pl.pallas_call(
        functools.partial(_gcnii_layer_kernel, beta=beta, residual=residual),
        out_shape=jax.ShapeDtypeStruct((n_pad, f_pad), jnp.float32),
        grid_spec=pltpu.PrefetchScalarGridSpec(
            num_scalar_prefetch=2,
            grid=(num_i, num_k),
            in_specs=in_specs,
            out_specs=pl.BlockSpec((tm, f_pad), lambda i, k, ki, kc: (i, 0)),
            scratch_shapes=[pltpu.VMEM((tm, f_pad), jnp.float32)]),
        compiler_params=pltpu.CompilerParams(
            dimension_semantics=("parallel", "arbitrary"),
            vmem_limit_bytes=_vmem_limit_bytes()),
    )(*operands)
    return out[:n, :f]


# --------------------------------------------------------------- reference ---

def gcnii_layer_reference(adj, feat, feat_0, weight, alpha, lamda, layer,
                          residual=False):
    beta = math.log(lamda / layer + 1.0)
    degs = jnp.maximum(jnp.sum(adj, axis=1, keepdims=True), 1.0)
    norm = degs ** -0.5
    h = feat * norm
    h = adj @ h
    h = h * norm
    feat_sum = h * (1.0 - alpha) + feat_0 * alpha
    rst = (1.0 - beta) * feat_sum + beta * (feat_sum @ weight)
    if residual:
        rst = rst + feat
    return rst


# --------------------------------------------------------------------- main --

if __name__ == "__main__":
    N, F = 256, 64
    ALPHA, LAMDA, LAYER = 0.1, 0.5, 1

    key = jax.random.PRNGKey(0)
    k_adj, k_feat, k_feat0, k_w = jax.random.split(key, 4)

    # Sparse-ish random graph + self-loops (no zero in-degree).
    adj = (jax.random.uniform(k_adj, (N, N)) < 0.05).astype(jnp.float32)
    adj = jnp.maximum(adj, jnp.eye(N, dtype=jnp.float32))

    feat = jax.random.normal(k_feat, (N, F), jnp.float32)
    feat_0 = jax.random.normal(k_feat0, (N, F), jnp.float32)
    std = 1.0 / math.sqrt(F)       # reset_parameters: uniform(-1/sqrt(out), ..)
    weight = jax.random.uniform(k_w, (F, F), jnp.float32, -std, std)

    out = jax.block_until_ready(
        gcnii_layer_forward(adj, feat, feat_0, weight, ALPHA, LAMDA, LAYER))
    ref = gcnii_layer_reference(adj, feat, feat_0, weight, ALPHA, LAMDA, LAYER)
    assert out.shape == (N, F)
    assert bool(jnp.all(jnp.isfinite(out)))
    err = float(jnp.max(jnp.abs(out - ref)))
    assert err < 5e-2, f"max abs err {err}"

    # residual branch
    out_r = jax.block_until_ready(
        gcnii_layer_forward(adj, feat, feat_0, weight, ALPHA, LAMDA, LAYER,
                            residual=True))
    ref_r = gcnii_layer_reference(adj, feat, feat_0, weight, ALPHA, LAMDA, LAYER,
                                  residual=True)
    err_r = float(jnp.max(jnp.abs(out_r - ref_r)))
    assert err_r < 5e-2, f"max abs err (residual) {err_r}"

    print("KERNEL_OK")
</pallas_src>

<mosaic_0001>
module attributes {stable_mosaic.version = 11 : i64} {
  func.func @_gcnii_layer_kernel(%arg0: i32, %arg1: i32, %arg2: memref<2xi32, #tpu.memory_space<smem>>, %arg3: memref<2xi32, #tpu.memory_space<smem>>, %arg4: memref<128x256xbf16, #tpu.memory_space<vmem>>, %arg5: memref<256x128xbf16, #tpu.memory_space<vmem>>, %arg6: memref<128x128xf32, #tpu.memory_space<vmem>>, %arg7: memref<128x128xbf16, #tpu.memory_space<vmem>>, %arg8: memref<128x128xf32, #tpu.memory_space<vmem>>, %arg9: memref<128x128xf32, #tpu.memory_space<vmem>>) attributes {dimension_semantics = [#tpu.dimension_semantics<parallel>, #tpu.dimension_semantics<arbitrary>], iteration_bounds = array<i64: 2, 1>, scalar_prefetch = 2 : i64, scratch_operands = 1 : i64, tpu.core_type = #tpu.core_type<tc>, window_params = [{transform_indices = @transform_0, window_bounds = array<i64: 128, 256>}, {transform_indices = @transform_1, window_bounds = array<i64: 256, 128>}, {transform_indices = @transform_2, window_bounds = array<i64: 128, 128>}, {pipeline_mode = #tpu.pipeline_mode<synchronous>, transform_indices = @transform_3, window_bounds = array<i64: 128, 128>}, {transform_indices = @transform_4, window_bounds = array<i64: 128, 128>}]} {
    %c0_i32 = arith.constant 0 : i32
    %0 = arith.cmpi eq, %arg1, %c0_i32 : i32
    %1 = arith.extui %0 : i1 to i32
    %c0_i32_0 = arith.constant 0 : i32
    %2 = arith.cmpi ne, %1, %c0_i32_0 : i32
    scf.if %2 {
      %cst = arith.constant 0.000000e+00 : f32
      %11 = vector.broadcast %cst : f32 to vector<128x128xf32>
      %c0 = arith.constant 0 : index
      %c0_4 = arith.constant 0 : index
      %12 = vector.load %arg9[%c0, %c0_4] : memref<128x128xf32, #tpu.memory_space<vmem>>, vector<128x128xf32>
      tpu.vector_store %arg9[%c0, %c0_4], %11 {strides = array<i32>} : memref<128x128xf32, #tpu.memory_space<vmem>>, vector<128x128xf32>,
    } else {
    }
    %3 = arith.index_cast %arg0 : i32 to index
    %4 = memref.load %arg3[%3] : memref<2xi32, #tpu.memory_space<smem>>
    %5 = arith.cmpi slt, %arg1, %4 : i32
    %6 = arith.extui %5 : i1 to i32
    %c0_i32_1 = arith.constant 0 : i32
    %7 = arith.cmpi ne, %6, %c0_i32_1 : i32
    scf.if %7 {
      %c0 = arith.constant 0 : index
      %c0_4 = arith.constant 0 : index
      %11 = vector.load %arg9[%c0, %c0_4] : memref<128x128xf32, #tpu.memory_space<vmem>>, vector<128x128xf32>
      %c0_5 = arith.constant 0 : index
      %c0_6 = arith.constant 0 : index
      %12 = vector.load %arg4[%c0_5, %c0_6] : memref<128x256xbf16, #tpu.memory_space<vmem>>, vector<128x256xbf16>
      %c0_7 = arith.constant 0 : index
      %c0_8 = arith.constant 0 : index
      %13 = vector.load %arg5[%c0_7, %c0_8] : memref<256x128xbf16, #tpu.memory_space<vmem>>, vector<256x128xbf16>
      %cst = arith.constant dense<0.000000e+00> : vector<128x128xf32>
      %14 = tpu.matmul %12, %13, %cst {dimension_numbers = #tpu.dot_dimension_numbers<[1], [0], [0], [1], [0, 0, 1, 1], [], []>} : vector<128x256xbf16>, vector<256x128xbf16>, vector<128x128xf32> -> vector<128x128xf32>
      %15 = arith.addf %11, %14 : vector<128x128xf32>
      %c0_9 = arith.constant 0 : index
      %c0_10 = arith.constant 0 : index
      %16 = vector.load %arg9[%c0_9, %c0_10] : memref<128x128xf32, #tpu.memory_space<vmem>>, vector<128x128xf32>
      tpu.vector_store %arg9[%c0_9, %c0_10], %15 {strides = array<i32>} : memref<128x128xf32, #tpu.memory_space<vmem>>, vector<128x128xf32>,
    } else {
    }
    %c0_i32_2 = arith.constant 0 : i32
    %8 = arith.cmpi eq, %arg1, %c0_i32_2 : i32
    %9 = arith.extui %8 : i1 to i32
    %c0_i32_3 = arith.constant 0 : i32
    %10 = arith.cmpi ne, %9, %c0_i32_3 : i32
    scf.if %10 {
      %c0 = arith.constant 0 : index
      %c0_4 = arith.constant 0 : index
      %11 = vector.load %arg9[%c0, %c0_4] : memref<128x128xf32, #tpu.memory_space<vmem>>, vector<128x128xf32>
      %c0_5 = arith.constant 0 : index
      %c0_6 = arith.constant 0 : index
      %12 = vector.load %arg6[%c0_5, %c0_6] : memref<128x128xf32, #tpu.memory_space<vmem>>, vector<128x128xf32>
      %13 = arith.addf %11, %12 : vector<128x128xf32>
      %cst = arith.constant 0.594534874 : f32
      %14 = vector.broadcast %cst : f32 to vector<128x128xf32>
      %15 = arith.mulf %14, %13 : vector<128x128xf32>
      %16 = arith.truncf %13 : vector<128x128xf32> to vector<128x128xbf16>
      %c0_7 = arith.constant 0 : index
      %c0_8 = arith.constant 0 : index
      %17 = vector.load %arg7[%c0_7, %c0_8] : memref<128x128xbf16, #tpu.memory_space<vmem>>, vector<128x128xbf16>
      %cst_9 = arith.constant dense<0.000000e+00> : vector<128x128xf32>
      %18 = tpu.matmul %16, %17, %cst_9 {dimension_numbers = #tpu.dot_dimension_numbers<[1], [0], [0], [1], [0, 0, 1, 1], [], []>} : vector<128x128xbf16>, vector<128x128xbf16>, vector<128x128xf32> -> vector<128x128xf32>
      %19 = arith.addf %15, %18 : vector<128x128xf32>
      %c0_10 = arith.constant 0 : index
      %c0_11 = arith.constant 0 : index
      %20 = vector.load %arg8[%c0_10, %c0_11] : memref<128x128xf32, #tpu.memory_space<vmem>>, vector<128x128xf32>
      tpu.vector_store %arg8[%c0_10, %c0_11], %19 {strides = array<i32>} : memref<128x128xf32, #tpu.memory_space<vmem>>, vector<128x128xf32>,
    } else {
    }
    return
  }
  func.func @transform_0(%arg0: i32, %arg1: i32, %arg2: memref<2xi32, #tpu.memory_space<smem>>, %arg3: memref<2xi32, #tpu.memory_space<smem>>) -> (i32, i32) {
    %c1_i32 = arith.constant 1 : i32
    %0 = arith.muli %arg0, %c1_i32 : i32
    %1 = arith.addi %0, %arg1 : i32
    %2 = arith.index_cast %1 : i32 to index
    %3 = memref.load %arg2[%2] : memref<2xi32, #tpu.memory_space<smem>>
    %c0_i32 = arith.constant 0 : i32
    return %arg0, %3 : i32, i32
  }
  func.func @transform_1(%arg0: i32, %arg1: i32, %arg2: memref<2xi32, #tpu.memory_space<smem>>, %arg3: memref<2xi32, #tpu.memory_space<smem>>) -> (i32, i32) {
    %c1_i32 = arith.constant 1 : i32
    %0 = arith.muli %arg0, %c1_i32 : i32
    %1 = arith.addi %0, %arg1 : i32
    %2 = arith.index_cast %1 : i32 to index
    %3 = memref.load %arg2[%2] : memref<2xi32, #tpu.memory_space<smem>>
    %c0_i32 = arith.constant 0 : i32
    %c0_i32_0 = arith.constant 0 : i32
    return %3, %c0_i32 : i32, i32
  }
  func.func @transform_2(%arg0: i32, %arg1: i32, %arg2: memref<2xi32, #tpu.memory_space<smem>>, %arg3: memref<2xi32, #tpu.memory_space<smem>>) -> (i32, i32) {
    %c0_i32 = arith.constant 0 : i32
    %c0_i32_0 = arith.constant 0 : i32
    return %arg0, %c0_i32 : i32, i32
  }
  func.func @transform_3(%arg0: i32, %arg1: i32, %arg2: memref<2xi32, #tpu.memory_space<smem>>, %arg3: memref<2xi32, #tpu.memory_space<smem>>) -> (i32, i32) {
    %c0_i32 = arith.constant 0 : i32
    %c0_i32_0 = arith.constant 0 : i32
    %c0_i32_1 = arith.constant 0 : i32
    return %c0_i32, %c0_i32_0 : i32, i32
  }
  func.func @transform_4(%arg0: i32, %arg1: i32, %arg2: memref<2xi32, #tpu.memory_space<smem>>, %arg3: memref<2xi32, #tpu.memory_space<smem>>) -> (i32, i32) {
    %c0_i32 = arith.constant 0 : i32
    %c0_i32_0 = arith.constant 0 : i32
    return %arg0, %c0_i32 : i32, i32
  }
}

</mosaic_0001>

<llo_original>
// kernel: gcnii_layer_forward.1
$region0: #{gcnii_layer_forward.1}
  #allocation0 [shape = 'u32[]', space=smem, size = 0x4, offset = 0x4, fixed_abs, tag = 'smem constant byte address 0x4 - core index']
  #allocation1 [shape = 'u32[72,128]{1,0:T(1,128)}', space=vmem, size = 0x9000, scoped, tag = 'internal scratch']
  #allocation2 [shape = 'f32[128,128]{1,0:T(8,128)}', space=vmem, size = 0x10000, scoped, tag = 'scratch operand']
  #allocation3 [shape = 's32[1]{0}', space=sflag, size = 0x4, scoped, tag = 'scoped memory for gcnii_layer_forward.1']
  #allocation4 [shape = 'u8[512]{0}', space=smem, size = 0x200, scoped, tag = 'prefetched SMEM operand 0']
  #allocation5 [shape = 'u8[512]{0}', space=smem, size = 0x200, scoped, tag = 'prefetched SMEM operand 1']
  %s0 = inlined_call_operand.vmem [shape: s32[2], index: 0, kind: input, shape index: {}]
  %s1 = inlined_call_operand.vmem [shape: s32[2], index: 1, kind: input, shape index: {}]
  %s2 = inlined_call_operand.vmem [shape: bf16[256,256], index: 2, kind: input, shape index: {}]
  %s3 = inlined_call_operand.vmem [shape: bf16[256,128], index: 3, kind: input, shape index: {}]
  %s4 = inlined_call_operand.vmem [shape: f32[256,128], index: 4, kind: input, shape index: {}]
  %s5 = inlined_call_operand.vmem [shape: bf16[128,128], index: 5, kind: input, shape index: {}]
  %s6 = inlined_call_operand.vmem [shape: f32[256,128], index: 6, kind: output, shape index: {}]
  %s7 = sld [smem:[#allocation0]]
  $region61: #{gcnii_layer_forward.1} parent=0
    _
  %s9 = ssub.s32 1, %s7
  %s10 = scalar_select 0, %s9, %s7
  %s12 = sshll.u32 %s0, 4
  %s13 = int_to_ptr.vmem [resolvable:$true] %s12
  %15 = dma.vmem_to_smem %s13, 16, [#allocation4], [#allocation3]
  %s17 = sshll.u32 %s1, 4
  %s18 = int_to_ptr.vmem [resolvable:$true] %s17
  %20 = dma.vmem_to_smem %s18, 16, [#allocation5], [#allocation3]
  %22 = dma.done [#allocation3], 32
  %23 = sfence
  loop: start=0, step=1, limit=4
  $region2: #{gcnii_layer_forward.1} parent=0 // loop_pre_header
    _
  $region3: #{gcnii_layer_forward.1} parent=0 // loop_header
    %s25 = sphi 0, %s29
    %p26 = scmp.ge.s32.totalorder %s25, 4
    %s32 = sphi 0, %s44
    %s33 = sphi 0, %s40
    %s34 = sphi 0, %s32
    %s35 = sphi 0, %s33
    %s36 = sphi 0, %s34
    %s37 = sphi 0, %s35
    %s53 = sphi 0, %s55
    %s56 = sphi 0, %s53
    %s57 = sphi 0, %s56
    %s73 = sphi 0, %s57
    %s83 = sphi 0, %s85
    %s86 = sphi 0, %s83
    %s87 = sphi 0, %s86
    %s103 = sphi 0, %s87
    %s109 = sphi 0, %s111
    %s112 = sphi 0, %s109
    %s113 = sphi 0, %s112
    %s129 = sphi 0, %s113
    %s133 = sphi 0, %s133
    %s135 = sphi 0, %s133
    %s136 = sphi 0, %s135
    %s150 = sphi 0, %s136
    %s156 = sphi 0, %s158
    %s159 = sphi 0, %s156
    %s160 = sphi 0, %s159
    %s176 = sphi 0, %s160
  $region4: #{gcnii_layer_forward.1} parent=0 // loop_header_branch
    %28 = sbr.rel (%p26) target = $region8
  $region5: #{gcnii_layer_forward.1} parent=0 // loop_body
    %s30 = ssub.s32 %s25, 1
    %s31 = ssub.s32 %s25, 2
    %s38 = sadd.s32 1, %s33
    %p39 = scmp.ge.s32.totalorder %s38, 1
    %s40 = scalar_select %p39, 0, %s38
    %s41 = sadd.s32 1, %s32
    %s42 = scalar_select %p39, %s41, %s32
    %p43 = scmp.ge.s32.totalorder %s42, 2
    %s44 = scalar_select %p43, 0, %s42
    %s45 = sadd.s32 %s32, %s33
    %s46 = sld [smem:[#allocation4 + %s45]]
    %s47 = sadd.s32 %s44, %s40
    %s48 = sld [smem:[#allocation4 + %s47]]
    %s49 = ssub.s32 %s32, %s44
    %s50 = ssub.s32 %s46, %s48
    %s51 = sor.u32 %s49, %s50
    %p52 = scmp.eq.s32.totalorder %s51, 0
    %s54 = sadd.s32 %s53, 1
    %s55 = scalar_select %p52, %s53, %s54
    %p58 = pneg %p52
    %p59 = scmp.eq.s32.totalorder %s25, 1
    %p60 = por %p58, %p59
    %p61 = scmp.ne.s32.totalorder %s53, %s56
    %p62 = scmp.eq.s32.totalorder %s25, 0
    %p63 = por %p61, %p62
    %p64 = scmp.ne.s32.totalorder %s53, %s56
    %p65 = scmp.eq.s32.totalorder %s30, 1
    %p66 = por %p64, %p65
    %p67 = scmp.ne.s32.totalorder %s56, %s57
    %p68 = scmp.eq.s32.totalorder %s30, 0
    %p69 = por %p67, %p68
    %p70 = scmp.ne.s32.totalorder %s56, %s57
    %p71 = scmp.eq.s32.totalorder %s31, 1
    %p72 = por %p70, %p71
    %p74 = scmp.ne.s32.totalorder %s57, %s73
    %p75 = scmp.eq.s32.totalorder %s31, 0
    %p76 = por %p74, %p75
    %s77 = sadd.s32 %s32, %s33
    %s78 = sld [smem:[#allocation4 + %s77]]
    %s79 = sadd.s32 %s44, %s40
    %s80 = sld [smem:[#allocation4 + %s79]]
    %s81 = ssub.s32 %s78, %s80
    %p82 = scmp.eq.s32.totalorder %s81, 0
    %s84 = sadd.s32 %s83, 1
    %s85 = scalar_select %p82, %s83, %s84
    %p88 = pneg %p82
    %p89 = scmp.eq.s32.totalorder %s25, 1
    %p90 = por %p88, %p89
    %p91 = scmp.ne.s32.totalorder %s83, %s86
    %p92 = scmp.eq.s32.totalorder %s25, 0
    %p93 = por %p91, %p92
    %p94 = scmp.ne.s32.totalorder %s83, %s86
    %p95 = scmp.eq.s32.totalorder %s30, 1
    %p96 = por %p94, %p95
    %p97 = scmp.ne.s32.totalorder %s86, %s87
    %p98 = scmp.eq.s32.totalorder %s30, 0
    %p99 = por %p97, %p98
    %p100 = scmp.ne.s32.totalorder %s86, %s87
    %p101 = scmp.eq.s32.totalorder %s31, 1
    %p102 = por %p100, %p101
    %p104 = scmp.ne.s32.totalorder %s87, %s103
    %p105 = scmp.eq.s32.totalorder %s31, 0
    %p106 = por %p104, %p105
    %s107 = ssub.s32 %s32, %s44
    %p108 = scmp.eq.s32.totalorder %s107, 0
    %s110 = sadd.s32 %s109, 1
    %s111 = scalar_select %p108, %s109, %s110
    %p114 = pneg %p108
    %p115 = scmp.eq.s32.totalorder %s25, 1
    %p116 = por %p114, %p115
    %p117 = scmp.ne.s32.totalorder %s109, %s112
    %p118 = scmp.eq.s32.totalorder %s25, 0
    %p119 = por %p117, %p118
    %p120 = scmp.ne.s32.totalorder %s109, %s112
    %p121 = scmp.eq.s32.totalorder %s30, 1
    %p122 = por %p120, %p121
    %p123 = scmp.ne.s32.totalorder %s112, %s113
    %p124 = scmp.eq.s32.totalorder %s30, 0
    %p125 = por %p123, %p124
    %p126 = scmp.ne.s32.totalorder %s112, %s113
    %p127 = scmp.eq.s32.totalorder %s31, 1
    %p128 = por %p126, %p127
    %p130 = scmp.ne.s32.totalorder %s113, %s129
    %p131 = scmp.eq.s32.totalorder %s31, 0
    %p132 = por %p130, %p131
    %s134 = sadd.s32 %s133, 1
    %p137 = scmp.eq.s32.totalorder %s25, 1
    %p138 = scmp.ne.s32.totalorder %s133, %s135
    %p139 = scmp.eq.s32.totalorder %s25, 0
    %p140 = por %p138, %p139
    %p141 = scmp.ne.s32.totalorder %s133, %s135
    %p142 = scmp.eq.s32.totalorder %s30, 1
    %p143 = por %p141, %p142
    %p144 = scmp.ne.s32.totalorder %s135, %s136
    %p145 = scmp.eq.s32.totalorder %s30, 0
    %p146 = por %p144, %p145
    %p147 = scmp.ne.s32.totalorder %s135, %s136
    %p148 = scmp.eq.s32.totalorder %s31, 1
    %p149 = por %p147, %p148
    %p151 = scmp.ne.s32.totalorder %s136, %s150
    %p152 = scmp.eq.s32.totalorder %s31, 0
    %p153 = por %p151, %p152
    %s154 = ssub.s32 %s32, %s44
    %p155 = scmp.eq.s32.totalorder %s154, 0
    %s157 = sadd.s32 %s156, 1
    %s158 = scalar_select %p155, %s156, %s157
    %p161 = pneg %p155
    %p162 = scmp.eq.s32.totalorder %s25, 1
    %p163 = por %p161, %p162
    %p164 = scmp.ne.s32.totalorder %s156, %s159
    %p165 = scmp.eq.s32.totalorder %s25, 0
    %p166 = por %p164, %p165
    %p167 = scmp.ne.s32.totalorder %s156, %s159
    %p168 = scmp.eq.s32.totalorder %s30, 1
    %p169 = por %p167, %p168
    %p170 = scmp.ne.s32.totalorder %s159, %s160
    %p171 = scmp.eq.s32.totalorder %s30, 0
    %p172 = por %p170, %p171
    %p173 = scmp.ne.s32.totalorder %s159, %s160
    %p174 = scmp.eq.s32.totalorder %s31, 1
    %p175 = por %p173, %p174
    %p177 = scmp.ne.s32.totalorder %s160, %s176
    %p178 = scmp.eq.s32.totalorder %s31, 0
    %p179 = por %p177, %p178
    %p180 = scmp.le.s32.totalorder 1, %s25
    %p181 = scmp.lt.s32.totalorder %s25, 3
    %p182 = pnand %p180, %p181
    %p183 = pneg %p182
    // Predicated region
    $region9: #{gcnii_layer_forward.1} parent=5 // pred_check
      _
    $region10: #{gcnii_layer_forward.1} parent=5 // pred_check_branch
      %185 = sbr.rel (%p182) target = $region12
    $region11: #{gcnii_layer_forward.1} parent=5 // pred_region
      %s186 = ssub.s32 %s25, 1
      // Predicated region
      $region13: #{gcnii_layer_forward.1} parent=11 // pred_check
        %p187 = pneg %p146
      $region14: #{gcnii_layer_forward.1} parent=11 // pred_check_branch
        %189 = sbr.rel (%p187) target = $region16
      $region15: #{gcnii_layer_forward.1} parent=11 // pred_region
        _
      $region16: #{gcnii_layer_forward.1} parent=11 // pred_fallthru
        _
    $region12: #{gcnii_layer_forward.1} parent=5 // pred_fallthru
      _
    %p190 = scmp.lt.s32.totalorder %s25, 2
    // Predicated region
    $region17: #{gcnii_layer_forward.1} parent=5 // pred_check
      %p191 = pneg %p190
    $region18: #{gcnii_layer_forward.1} parent=5 // pred_check_branch
      %193 = sbr.rel (%p191) target = $region20
    $region19: #{gcnii_layer_forward.1} parent=5 // pred_region
      // Predicated region
      $region21: #{gcnii_layer_forward.1} parent=19 // pred_check
        %p194 = pneg %p63
      $region22: #{gcnii_layer_forward.1} parent=19 // pred_check_branch
        %196 = sbr.rel (%p194) target = $region24
      $region23: #{gcnii_layer_forward.1} parent=19 // pred_region
        %s197 = sadd.s32 %s32, %s33
        %s198 = sld [smem:[#allocation4 + %s197]]
        %s199 = smul.u32 16, %s32
        %s200 = smul.u32 2, %s198
        %p201 = scmp.lt.s32.totalorder %s199, 31
        %s202 = scalar_select %p201, %s199, 31
        %p203 = scmp.lt.s32.totalorder %s200, 1
        %s204 = scalar_select %p203, %s200, 1
        %s205 = smul.addr %s202, 2
        %s206 = sadd.s32 %s204, %s205
        %s207 = smul.addr %s206, 4
        %s208 = scalar_lea.vmem %s2, %s207
        %s209 = sadd.s32 %s32, %s33
        %s210 = sld [smem:[#allocation4 + %s209]]
        %s211 = smul.u32 16, %s32
        %s212 = smul.u32 2, %s210
      $region24: #{gcnii_layer_forward.1} parent=19 // pred_fallthru
        _
      // Predicated region
      $region25: #{gcnii_layer_forward.1} parent=19 // pred_check
        %p213 = pneg %p93
      $region26: #{gcnii_layer_forward.1} parent=19 // pred_check_branch
        %215 = sbr.rel (%p213) target = $region28
      $region27: #{gcnii_layer_forward.1} parent=19 // pred_region
        %s216 = sadd.s32 %s32, %s33
        %s217 = sld [smem:[#allocation4 + %s216]]
        %s218 = smul.u32 32, %s217
        %p219 = scmp.lt.s32.totalorder %s218, 31
        %s220 = scalar_select %p219, %s218, 31
        %s221 = smul.addr %s220, 4
        %s222 = scalar_lea.vmem %s3, %s221
        %s223 = sadd.s32 %s32, %s33
        %s224 = sld [smem:[#allocation4 + %s223]]
        %s225 = smul.u32 32, %s224
      $region28: #{gcnii_layer_forward.1} parent=19 // pred_fallthru
        _
      // Predicated region
      $region29: #{gcnii_layer_forward.1} parent=19 // pred_check
        %p226 = pneg %p119
      $region30: #{gcnii_layer_forward.1} parent=19 // pred_check_branch
        %228 = sbr.rel (%p226) target = $region32
      $region31: #{gcnii_layer_forward.1} parent=19 // pred_region
        %s229 = smul.u32 16, %s32
        %p230 = scmp.lt.s32.totalorder %s229, 31
        %s231 = scalar_select %p230, %s229, 31
        %s232 = smul.addr %s231, 8
        %s233 = scalar_lea.vmem %s4, %s232
        %s234 = smul.u32 16, %s32
      $region32: #{gcnii_layer_forward.1} parent=19 // pred_fallthru
        _
    $region20: #{gcnii_layer_forward.1} parent=5 // pred_fallthru
      _
    %p235 = scmp.le.s32.totalorder 1, %s25
    %p236 = scmp.lt.s32.totalorder %s25, 3
    %p237 = pnand %p235, %p236
    %p238 = pneg %p237
    // Predicated region
    $region33: #{gcnii_layer_forward.1} parent=5 // pred_check
      _
    $region34: #{gcnii_layer_forward.1} parent=5 // pred_check_branch
      %240 = sbr.rel (%p237) target = $region36
    $region35: #{gcnii_layer_forward.1} parent=5 // pred_region
      %s241 = ssub.s32 %s25, 1
      %s242 = sadd.s32 %s34, %s35
      %s243 = sld [smem:[#allocation4 + %s242]]
      %s244 = smul.u32 16, %s34
      %s245 = smul.u32 2, %s243
      %p246 = scmp.lt.s32.totalorder %s244, 31
      %s247 = scalar_select %p246, %s244, 31
      %p248 = scmp.lt.s32.totalorder %s245, 1
      %s249 = scalar_select %p248, %s245, 1
      %s250 = smul.addr %s247, 2
      %s251 = sadd.s32 %s249, %s250
      %s252 = smul.addr %s251, 4
      %s253 = scalar_lea.vmem %s2, %s252
      %p254 = pneg %p69
      %p255 = pneg %p66
      %s256 = sadd.s32 %s34, %s35
      %s257 = sld [smem:[#allocation4 + %s256]]
      %s258 = smul.u32 32, %s257
      %p259 = scmp.lt.s32.totalorder %s258, 31
      %s260 = scalar_select %p259, %s258, 31
      %s261 = smul.addr %s260, 4
      %s262 = scalar_lea.vmem %s3, %s261
      %p263 = pneg %p99
      %p264 = pneg %p96
      %s265 = smul.u32 16, %s34
      %p266 = scmp.lt.s32.totalorder %s265, 31
      %s267 = scalar_select %p266, %s265, 31
      %s268 = smul.addr %s267, 8
      %s269 = scalar_lea.vmem %s4, %s268
      %p270 = pneg %p125
      %p271 = pneg %p122
      %p272 = pneg %p146
      %p273 = pneg %p143
      %p274 = pneg %p172
      %p275 = pneg %p169
      %s276 = smul.u32 16, %s34
      %p277 = scmp.lt.s32.totalorder %s276, 31
      %s278 = scalar_select %p277, %s276, 31
      %s279 = smul.addr %s278, 8
      %s280 = scalar_lea.vmem %s6, %s279
      %s281 = sadd.s32 %s34, %s35
      %s282 = sld [smem:[#allocation4 + %s281]]
      %s283 = smul.u32 16, %s34
      %s284 = smul.u32 2, %s282
      %p285 = scmp.lt.s32.totalorder %s283, 31
      %s286 = scalar_select %p285, %s283, 31
      %p287 = scmp.lt.s32.totalorder %s284, 1
      %s288 = scalar_select %p287, %s284, 1
      %s289 = smul.addr %s286, 2
      %s290 = sadd.s32 %s288, %s289
      %s291 = smul.addr %s290, 4
      %s292 = scalar_lea.vmem %s2, %s291
      %s293 = sadd.s32 %s34, %s35
      %s294 = sld [smem:[#allocation4 + %s293]]
      %s295 = smul.u32 16, %s34
      %s296 = smul.u32 2, %s294
      %s297 = sadd.s32 %s34, %s35
      %s298 = sld [smem:[#allocation4 + %s297]]
      %s299 = smul.u32 32, %s298
      %p300 = scmp.lt.s32.totalorder %s299, 31
      %s301 = scalar_select %p300, %s299, 31
      %s302 = smul.addr %s301, 4
      %s303 = scalar_lea.vmem %s3, %s302
      %s304 = sadd.s32 %s34, %s35
      %s305 = sld [smem:[#allocation4 + %s304]]
      %s306 = smul.u32 32, %s305
      %s307 = smul.u32 16, %s34
      %p308 = scmp.lt.s32.totalorder %s307, 31
      %s309 = scalar_select %p308, %s307, 31
      %s310 = smul.addr %s309, 8
      %s311 = scalar_lea.vmem %s4, %s310
      %s312 = smul.u32 16, %s34
      %s313 = smul.u32 16, %s34
      %p314 = scmp.lt.s32.totalorder %s313, 31
      %s315 = scalar_select %p314, %s313, 31
      %s316 = smul.addr %s315, 8
      %s317 = scalar_lea.vmem %s6, %s316
      %s318 = smul.u32 16, %s34
      %p319 = scmp.eq.s32.totalorder %s35, 0
      // Predicated region
      $region37: #{gcnii_layer_forward.1} parent=35 // pred_check
        %p320 = pneg %p319
      $region38: #{gcnii_layer_forward.1} parent=35 // pred_check_branch
        %322 = sbr.rel (%p320) target = $region40
      $region39: #{gcnii_layer_forward.1} parent=35 // pred_region
        %323 = vst [vmem:[#allocation2] sm:$0xff] 0.0
        %324 = vst [vmem:[#allocation2 + $0x8] sm:$0xff] 0.0
        %325 = vst [vmem:[#allocation2 + $0x10] sm:$0xff] 0.0
        %326 = vst [vmem:[#allocation2 + $0x18] sm:$0xff] 0.0
        %327 = vst [vmem:[#allocation2 + $0x20] sm:$0xff] 0.0
        %328 = vst [vmem:[#allocation2 + $0x28] sm:$0xff] 0.0
        %329 = vst [vmem:[#allocation2 + $0x30] sm:$0xff] 0.0
        %330 = vst [vmem:[#allocation2 + $0x38] sm:$0xff] 0.0
        %331 = vst [vmem:[#allocation2 + $0x40] sm:$0xff] 0.0
        %332 = vst [vmem:[#allocation2 + $0x48] sm:$0xff] 0.0
        %333 = vst [vmem:[#allocation2 + $0x50] sm:$0xff] 0.0
        %334 = vst [vmem:[#allocation2 + $0x58] sm:$0xff] 0.0
        %335 = vst [vmem:[#allocation2 + $0x60] sm:$0xff] 0.0
        %336 = vst [vmem:[#allocation2 + $0x68] sm:$0xff] 0.0
        %337 = vst [vmem:[#allocation2 + $0x70] sm:$0xff] 0.0
        %338 = vst [vmem:[#allocation2 + $0x78] sm:$0xff] 0.0
      $region40: #{gcnii_layer_forward.1} parent=35 // pred_fallthru
        _
      %s339 = sld [smem:[#allocation5 + %s34]]
      %p340 = scmp.lt.s32.totalorder %s35, %s339
      // Predicated region
      $region41: #{gcnii_layer_forward.1} parent=35 // pred_check
        %p341 = pneg %p340
      $region42: #{gcnii_layer_forward.1} parent=35 // pred_check_branch
        %343 = sbr.rel (%p341) target = $region44
      $region43: #{gcnii_layer_forward.1} parent=35 // pred_region
        %v344 = vld [vmem:[#allocation2] sm:$0xff]
        %v345 = vld [vmem:[#allocation2 + $0x8] sm:$0xff]
        %v346 = vld [vmem:[#allocation2 + $0x10] sm:$0xff]
        %v347 = vld [vmem:[#allocation2 + $0x18] sm:$0xff]
        %v348 = vld [vmem:[#allocation2 + $0x20] sm:$0xff]
        %v349 = vld [vmem:[#allocation2 + $0x28] sm:$0xff]
        %v350 = vld [vmem:[#allocation2 + $0x30] sm:$0xff]
        %v351 = vld [vmem:[#allocation2 + $0x38] sm:$0xff]
        %v352 = vld [vmem:[#allocation2 + $0x40] sm:$0xff]
        %v353 = vld [vmem:[#allocation2 + $0x48] sm:$0xff]
        %v354 = vld [vmem:[#allocation2 + $0x50] sm:$0xff]
        %v355 = vld [vmem:[#allocation2 + $0x58] sm:$0xff]
        %v356 = vld [vmem:[#allocation2 + $0x60] sm:$0xff]
        %v357 = vld [vmem:[#allocation2 + $0x68] sm:$0xff]
        %v358 = vld [vmem:[#allocation2 + $0x70] sm:$0xff]
        %v359 = vld [vmem:[#allocation2 + $0x78] sm:$0xff]
        %v360 = vld [vmem:[%s292] sm:$0xff]
        %v361 = vld [vmem:[%s292 + $0x8] sm:$0xff]
        %v362 = vld [vmem:[%s292 + $0x10] sm:$0xff]
        %v363 = vld [vmem:[%s292 + $0x18] sm:$0xff]
        %v364 = vld [vmem:[%s292 + $0x20] sm:$0xff]
        %v365 = vld [vmem:[%s292 + $0x28] sm:$0xff]
        %v366 = vld [vmem:[%s292 + $0x30] sm:$0xff]
        %v367 = vld [vmem:[%s292 + $0x38] sm:$0xff]
        %v368 = vld [vmem:[%s292 + $0x40] sm:$0xff]
        %v369 = vld [vmem:[%s292 + $0x48] sm:$0xff]
        %v370 = vld [vmem:[%s292 + $0x50] sm:$0xff]
        %v371 = vld [vmem:[%s292 + $0x58] sm:$0xff]
        %v372 = vld [vmem:[%s292 + $0x60] sm:$0xff]
        %v373 = vld [vmem:[%s292 + $0x68] sm:$0xff]
        %v374 = vld [vmem:[%s292 + $0x70] sm:$0xff]
        %v375 = vld [vmem:[%s292 + $0x78] sm:$0xff]
        %v376 = vld [vmem:[%s303] sm:$0xf]
        %v377 = vld [vmem:[%s303 + $0x4] sm:$0xf]
        %v378 = vld [vmem:[%s303 + $0x8] sm:$0xf]
        %v379 = vld [vmem:[%s303 + $0xc] sm:$0xf]
        %v380 = vld [vmem:[%s303 + $0x10] sm:$0xf]
        %v381 = vld [vmem:[%s303 + $0x14] sm:$0xf]
        %v382 = vld [vmem:[%s303 + $0x18] sm:$0xf]
        %v383 = vld [vmem:[%s303 + $0x1c] sm:$0xf]
        %v384 = vld [vmem:[%s303 + $0x20] sm:$0xf]
        %v385 = vld [vmem:[%s303 + $0x24] sm:$0xf]
        %v386 = vld [vmem:[%s303 + $0x28] sm:$0xf]
        %v387 = vld [vmem:[%s303 + $0x2c] sm:$0xf]
        %v388 = vld [vmem:[%s303 + $0x30] sm:$0xf]
        %v389 = vld [vmem:[%s303 + $0x34] sm:$0xf]
        %v390 = vld [vmem:[%s303 + $0x38] sm:$0xf]
        %v391 = vld [vmem:[%s303 + $0x3c] sm:$0xf]
        %v392 = vld [vmem:[%s303 + $0x40] sm:$0xf]
        %v393 = vld [vmem:[%s303 + $0x44] sm:$0xf]
        %v394 = vld [vmem:[%s303 + $0x48] sm:$0xf]
        %v395 = vld [vmem:[%s303 + $0x4c] sm:$0xf]
        %v396 = vld [vmem:[%s303 + $0x50] sm:$0xf]
        %v397 = vld [vmem:[%s303 + $0x54] sm:$0xf]
        %v398 = vld [vmem:[%s303 + $0x58] sm:$0xf]
        %v399 = vld [vmem:[%s303 + $0x5c] sm:$0xf]
        %v400 = vld [vmem:[%s303 + $0x60] sm:$0xf]
        %v401 = vld [vmem:[%s303 + $0x64] sm:$0xf]
        %v402 = vld [vmem:[%s303 + $0x68] sm:$0xf]
        %v403 = vld [vmem:[%s303 + $0x6c] sm:$0xf]
        %v404 = vld [vmem:[%s303 + $0x70] sm:$0xf]
        %v405 = vld [vmem:[%s303 + $0x74] sm:$0xf]
        %v406 = vld [vmem:[%s303 + $0x78] sm:$0xf]
        %v407 = vld [vmem:[%s303 + $0x7c] sm:$0xf]
        %v424 = vunpack.c.l.b16 %v360
        %v425 = vunpack.c.h.b16 %v360
        %v426 = vunpack.c.l.b16 %v361
        %v427 = vunpack.c.h.b16 %v361
        %v428 = vunpack.c.l.b16 %v362
        %v429 = vunpack.c.h.b16 %v362
        %v430 = vunpack.c.l.b16 %v363
        %v431 = vunpack.c.h.b16 %v363
        %v432 = vunpack.c.l.b16 %v364
        %v433 = vunpack.c.h.b16 %v364
        %v434 = vunpack.c.l.b16 %v365
        %v435 = vunpack.c.h.b16 %v365
        %v436 = vunpack.c.l.b16 %v366
        %v437 = vunpack.c.h.b16 %v366
        %v438 = vunpack.c.l.b16 %v367
        %v439 = vunpack.c.h.b16 %v367
        %v440 = vunpack.c.l.b16 %v368
        %v441 = vunpack.c.h.b16 %v368
        %v442 = vunpack.c.l.b16 %v369
        %v443 = vunpack.c.h.b16 %v369
        %v444 = vunpack.c.l.b16 %v370
        %v445 = vunpack.c.h.b16 %v370
        %v446 = vunpack.c.l.b16 %v371
        %v447 = vunpack.c.h.b16 %v371
        %v448 = vunpack.c.l.b16 %v372
        %v449 = vunpack.c.h.b16 %v372
        %v450 = vunpack.c.l.b16 %v373
        %v451 = vunpack.c.h.b16 %v373
        %v452 = vunpack.c.l.b16 %v374
        %v453 = vunpack.c.h.b16 %v374
        %v454 = vunpack.c.l.b16 %v375
        %v455 = vunpack.c.h.b16 %v375
        %v456 = vpack.c.b16 %v426, %v424
        %v457 = vpack.c.b16 %v427, %v425
        %v458 = vpack.c.b16 %v430, %v428
        %v459 = vpack.c.b16 %v431, %v429
        %v460 = vpack.c.b16 %v434, %v432
        %v461 = vpack.c.b16 %v435, %v433
        %v462 = vpack.c.b16 %v438, %v436
        %v463 = vpack.c.b16 %v439, %v437
        %v464 = vpack.c.b16 %v442, %v440
        %v465 = vpack.c.b16 %v443, %v441
        %v466 = vpack.c.b16 %v446, %v444
        %v467 = vpack.c.b16 %v447, %v445
        %v468 = vpack.c.b16 %v450, %v448
        %v469 = vpack.c.b16 %v451, %v449
        %v470 = vpack.c.b16 %v454, %v452
        %v471 = vpack.c.b16 %v455, %v453
        %v520 = vunpack.c.l.b16 %v376
        %v521 = vunpack.c.l.b16 %v377
        %v522 = vunpack.c.l.b16 %v378
        %v523 = vunpack.c.l.b16 %v379
        %v524 = vunpack.c.l.b16 %v380
        %v525 = vunpack.c.l.b16 %v381
        %v526 = vunpack.c.l.b16 %v382
        %v527 = vunpack.c.l.b16 %v383
        %v528 = vunpack.c.l.b16 %v384
        %v529 = vunpack.c.l.b16 %v385
        %v530 = vunpack.c.l.b16 %v386
        %v531 = vunpack.c.l.b16 %v387
        %v532 = vunpack.c.l.b16 %v388
        %v533 = vunpack.c.l.b16 %v389
        %v534 = vunpack.c.l.b16 %v390
        %v535 = vunpack.c.l.b16 %v391
        %v536 = vunpack.c.l.b16 %v392
        %v537 = vunpack.c.l.b16 %v393
        %v538 = vunpack.c.l.b16 %v394
        %v539 = vunpack.c.l.b16 %v395
        %v540 = vunpack.c.l.b16 %v396
        %v541 = vunpack.c.l.b16 %v397
        %v542 = vunpack.c.l.b16 %v398
        %v543 = vunpack.c.l.b16 %v399
        %v544 = vunpack.c.l.b16 %v400
        %v545 = vunpack.c.l.b16 %v401
        %v546 = vunpack.c.l.b16 %v402
        %v547 = vunpack.c.l.b16 %v403
        %v548 = vunpack.c.l.b16 %v404
        %v549 = vunpack.c.l.b16 %v405
        %v550 = vunpack.c.l.b16 %v406
        %v551 = vunpack.c.l.b16 %v407
        %v552 = vpack.c.b16 %v521, %v520
        %v553 = vpack.c.b16 %v523, %v522
        %v554 = vpack.c.b16 %v525, %v524
        %v555 = vpack.c.b16 %v527, %v526
        %v556 = vpack.c.b16 %v529, %v528
        %v557 = vpack.c.b16 %v531, %v530
        %v558 = vpack.c.b16 %v533, %v532
        %v559 = vpack.c.b16 %v535, %v534
        %v560 = vpack.c.b16 %v537, %v536
        %v561 = vpack.c.b16 %v539, %v538
        %v562 = vpack.c.b16 %v541, %v540
        %v563 = vpack.c.b16 %v543, %v542
        %v564 = vpack.c.b16 %v545, %v544
        %v565 = vpack.c.b16 %v547, %v546
        %v566 = vpack.c.b16 %v549, %v548
        %v567 = vpack.c.b16 %v551, %v550
        %584 = vmatpush.bf16.msra.mxu0 %v559
        %585 = vmatpush.bf16.msra.mxu0 %v558
        %586 = vmatpush.bf16.msra.mxu0 %v557
        %587 = vmatpush.bf16.msra.mxu0 %v556
        %588 = vmatpush.bf16.msra.mxu0 %v555
        %589 = vmatpush.bf16.msra.mxu0 %v554
        %590 = vmatpush.bf16.msra.mxu0 %v553
        %591 = vmatpush.bf16.msra.mxu0 %v552
        %592 = vmatmul.bf16.gmra.mxu0 %v456
        %v593 = vpop.f32.mrf.mxu0
        %v594 = vadd.f32 0.0, %v593
        %v595 = vpop.f32.mrf.mxu0
        %v596 = vadd.f32 0.0, %v595
        %597 = vmatmul.bf16.gmra.mxu0 %v458
        %v598 = vpop.f32.mrf.mxu0
        %v599 = vadd.f32 0.0, %v598
        %v600 = vpop.f32.mrf.mxu0
        %v601 = vadd.f32 0.0, %v600
        %602 = vmatmul.bf16.gmra.mxu0 %v460
        %v603 = vpop.f32.mrf.mxu0
        %v604 = vadd.f32 0.0, %v603
        %v605 = vpop.f32.mrf.mxu0
        %v606 = vadd.f32 0.0, %v605
        %607 = vmatmul.bf16.gmra.mxu0 %v462
        %v608 = vpop.f32.mrf.mxu0
        %v609 = vadd.f32 0.0, %v608
        %v610 = vpop.f32.mrf.mxu0
        %v611 = vadd.f32 0.0, %v610
        %612 = vmatmul.bf16.gmra.mxu0 %v464
        %v613 = vpop.f32.mrf.mxu0
        %v614 = vadd.f32 0.0, %v613
        %v615 = vpop.f32.mrf.mxu0
        %v616 = vadd.f32 0.0, %v615
        %617 = vmatmul.bf16.gmra.mxu0 %v466
        %v618 = vpop.f32.mrf.mxu0
        %v619 = vadd.f32 0.0, %v618
        %v620 = vpop.f32.mrf.mxu0
        %v621 = vadd.f32 0.0, %v620
        %622 = vmatmul.bf16.gmra.mxu0 %v468
        %v623 = vpop.f32.mrf.mxu0
        %v624 = vadd.f32 0.0, %v623
        %v625 = vpop.f32.mrf.mxu0
        %v626 = vadd.f32 0.0, %v625
        %627 = vmatmul.bf16.gmra.mxu0 %v470
        %v628 = vpop.f32.mrf.mxu0
        %v629 = vadd.f32 0.0, %v628
        %v630 = vpop.f32.mrf.mxu0
        %v631 = vadd.f32 0.0, %v630
        %632 = vdwg.mxu0
        %633 = vmatpush.bf16.msra.mxu0 %v567
        %634 = vmatpush.bf16.msra.mxu0 %v566
        %635 = vmatpush.bf16.msra.mxu0 %v565
        %636 = vmatpush.bf16.msra.mxu0 %v564
        %637 = vmatpush.bf16.msra.mxu0 %v563
        %638 = vmatpush.bf16.msra.mxu0 %v562
        %639 = vmatpush.bf16.msra.mxu0 %v561
        %640 = vmatpush.bf16.msra.mxu0 %v560
        %641 = vmatmul.bf16.gmra.mxu0 %v457
        %v642 = vpop.f32.mrf.mxu0
        %v643 = vadd.f32 %v594, %v642
        %v644 = vpop.f32.mrf.mxu0
        %v645 = vadd.f32 %v596, %v644
        %646 = vmatmul.bf16.gmra.mxu0 %v459
        %v647 = vpop.f32.mrf.mxu0
        %v648 = vadd.f32 %v599, %v647
        %v649 = vpop.f32.mrf.mxu0
        %v650 = vadd.f32 %v601, %v649
        %651 = vmatmul.bf16.gmra.mxu0 %v461
        %v652 = vpop.f32.mrf.mxu0
        %v653 = vadd.f32 %v604, %v652
        %v654 = vpop.f32.mrf.mxu0
        %v655 = vadd.f32 %v606, %v654
        %656 = vmatmul.bf16.gmra.mxu0 %v463
        %v657 = vpop.f32.mrf.mxu0
        %v658 = vadd.f32 %v609, %v657
        %v659 = vpop.f32.mrf.mxu0
        %v660 = vadd.f32 %v611, %v659
        %661 = vmatmul.bf16.gmra.mxu0 %v465
        %v662 = vpop.f32.mrf.mxu0
        %v663 = vadd.f32 %v614, %v662
        %v664 = vpop.f32.mrf.mxu0
        %v665 = vadd.f32 %v616, %v664
        %666 = vmatmul.bf16.gmra.mxu0 %v467
        %v667 = vpop.f32.mrf.mxu0
        %v668 = vadd.f32 %v619, %v667
        %v669 = vpop.f32.mrf.mxu0
        %v670 = vadd.f32 %v621, %v669
        %671 = vmatmul.bf16.gmra.mxu0 %v469
        %v672 = vpop.f32.mrf.mxu0
        %v673 = vadd.f32 %v624, %v672
        %v674 = vpop.f32.mrf.mxu0
        %v675 = vadd.f32 %v626, %v674
        %676 = vmatmul.bf16.gmra.mxu0 %v471
        %v677 = vpop.f32.mrf.mxu0
        %v678 = vadd.f32 %v629, %v677
        %v679 = vpop.f32.mrf.mxu0
        %v680 = vadd.f32 %v631, %v679
        %681 = vdwg.mxu0
        %v682 = vadd.f32 %v344, %v643
        %v683 = vadd.f32 %v345, %v645
        %v684 = vadd.f32 %v346, %v648
        %v685 = vadd.f32 %v347, %v650
        %v686 = vadd.f32 %v348, %v653
        %v687 = vadd.f32 %v349, %v655
        %v688 = vadd.f32 %v350, %v658
        %v689 = vadd.f32 %v351, %v660
        %v690 = vadd.f32 %v352, %v663
        %v691 = vadd.f32 %v353, %v665
        %v692 = vadd.f32 %v354, %v668
        %v693 = vadd.f32 %v355, %v670
        %v694 = vadd.f32 %v356, %v673
        %v695 = vadd.f32 %v357, %v675
        %v696 = vadd.f32 %v358, %v678
        %v697 = vadd.f32 %v359, %v680
        %698 = vst [vmem:[#allocation2] sm:$0xff] %v682
        %699 = vst [vmem:[#allocation2 + $0x8] sm:$0xff] %v683
        %700 = vst [vmem:[#allocation2 + $0x10] sm:$0xff] %v684
        %701 = vst [vmem:[#allocation2 + $0x18] sm:$0xff] %v685
        %702 = vst [vmem:[#allocation2 + $0x20] sm:$0xff] %v686
        %703 = vst [vmem:[#allocation2 + $0x28] sm:$0xff] %v687
        %704 = vst [vmem:[#allocation2 + $0x30] sm:$0xff] %v688
        %705 = vst [vmem:[#allocation2 + $0x38] sm:$0xff] %v689
        %706 = vst [vmem:[#allocation2 + $0x40] sm:$0xff] %v690
        %707 = vst [vmem:[#allocation2 + $0x48] sm:$0xff] %v691
        %708 = vst [vmem:[#allocation2 + $0x50] sm:$0xff] %v692
        %709 = vst [vmem:[#allocation2 + $0x58] sm:$0xff] %v693
        %710 = vst [vmem:[#allocation2 + $0x60] sm:$0xff] %v694
        %711 = vst [vmem:[#allocation2 + $0x68] sm:$0xff] %v695
        %712 = vst [vmem:[#allocation2 + $0x70] sm:$0xff] %v696
        %713 = vst [vmem:[#allocation2 + $0x78] sm:$0xff] %v697
      $region44: #{gcnii_layer_forward.1} parent=35 // pred_fallthru
        _
      // Predicated region
      $region45: #{gcnii_layer_forward.1} parent=35 // pred_check
        %p714 = pneg %p319
      $region46: #{gcnii_layer_forward.1} parent=35 // pred_check_branch
        %716 = sbr.rel (%p714) target = $region48
      $region47: #{gcnii_layer_forward.1} parent=35 // pred_region
        %v717 = vld [vmem:[#allocation2] sm:$0xff]
        %v718 = vld [vmem:[#allocation2 + $0x8] sm:$0xff]
        %v719 = vld [vmem:[#allocation2 + $0x10] sm:$0xff]
        %v720 = vld [vmem:[#allocation2 + $0x18] sm:$0xff]
        %v721 = vld [vmem:[#allocation2 + $0x20] sm:$0xff]
        %v722 = vld [vmem:[#allocation2 + $0x28] sm:$0xff]
        %v723 = vld [vmem:[#allocation2 + $0x30] sm:$0xff]
        %v724 = vld [vmem:[#allocation2 + $0x38] sm:$0xff]
        %v725 = vld [vmem:[#allocation2 + $0x40] sm:$0xff]
        %v726 = vld [vmem:[#allocation2 + $0x48] sm:$0xff]
        %v727 = vld [vmem:[#allocation2 + $0x50] sm:$0xff]
        %v728 = vld [vmem:[#allocation2 + $0x58] sm:$0xff]
        %v729 = vld [vmem:[#allocation2 + $0x60] sm:$0xff]
        %v730 = vld [vmem:[#allocation2 + $0x68] sm:$0xff]
        %v731 = vld [vmem:[#allocation2 + $0x70] sm:$0xff]
        %v732 = vld [vmem:[#allocation2 + $0x78] sm:$0xff]
        %v733 = vld [vmem:[%s311] sm:$0xff]
        %v734 = vld [vmem:[%s311 + $0x8] sm:$0xff]
        %v735 = vld [vmem:[%s311 + $0x10] sm:$0xff]
        %v736 = vld [vmem:[%s311 + $0x18] sm:$0xff]
        %v737 = vld [vmem:[%s311 + $0x20] sm:$0xff]
        %v738 = vld [vmem:[%s311 + $0x28] sm:$0xff]
        %v739 = vld [vmem:[%s311 + $0x30] sm:$0xff]
        %v740 = vld [vmem:[%s311 + $0x38] sm:$0xff]
        %v741 = vld [vmem:[%s311 + $0x40] sm:$0xff]
        %v742 = vld [vmem:[%s311 + $0x48] sm:$0xff]
        %v743 = vld [vmem:[%s311 + $0x50] sm:$0xff]
        %v744 = vld [vmem:[%s311 + $0x58] sm:$0xff]
        %v745 = vld [vmem:[%s311 + $0x60] sm:$0xff]
        %v746 = vld [vmem:[%s311 + $0x68] sm:$0xff]
        %v747 = vld [vmem:[%s311 + $0x70] sm:$0xff]
        %v748 = vld [vmem:[%s311 + $0x78] sm:$0xff]
        %v749 = vadd.f32 %v717, %v733
        %v750 = vadd.f32 %v718, %v734
        %v751 = vadd.f32 %v719, %v735
        %v752 = vadd.f32 %v720, %v736
        %v753 = vadd.f32 %v721, %v737
        %v754 = vadd.f32 %v722, %v738
        %v755 = vadd.f32 %v723, %v739
        %v756 = vadd.f32 %v724, %v740
        %v757 = vadd.f32 %v725, %v741
        %v758 = vadd.f32 %v726, %v742
        %v759 = vadd.f32 %v727, %v743
        %v760 = vadd.f32 %v728, %v744
        %v761 = vadd.f32 %v729, %v745
        %v762 = vadd.f32 %v730, %v746
        %v763 = vadd.f32 %v731, %v747
        %v764 = vadd.f32 %v732, %v748
        %v765 = vmul.f32 %v749, 0.5945349
        %v766 = vmul.f32 %v750, 0.5945349
        %v767 = vmul.f32 %v751, 0.5945349
        %v768 = vmul.f32 %v752, 0.5945349
        %v769 = vmul.f32 %v753, 0.5945349
        %v770 = vmul.f32 %v754, 0.5945349
        %v771 = vmul.f32 %v755, 0.5945349
        %v772 = vmul.f32 %v756, 0.5945349
        %v773 = vmul.f32 %v757, 0.5945349
        %v774 = vmul.f32 %v758, 0.5945349
        %v775 = vmul.f32 %v759, 0.5945349
        %v776 = vmul.f32 %v760, 0.5945349
        %v777 = vmul.f32 %v761, 0.5945349
        %v778 = vmul.f32 %v762, 0.5945349
        %v779 = vmul.f32 %v763, 0.5945349
        %v780 = vmul.f32 %v764, 0.5945349
        %v781 = vpack.c.bf16 %v750, %v749
        %v782 = vpack.c.bf16 %v752, %v751
        %v783 = vpack.c.bf16 %v754, %v753
        %v784 = vpack.c.bf16 %v756, %v755
        %v785 = vpack.c.bf16 %v758, %v757
        %v786 = vpack.c.bf16 %v760, %v759
        %v787 = vpack.c.bf16 %v762, %v761
        %v788 = vpack.c.bf16 %v764, %v763
        %v789 = vld [vmem:[%s5] sm:$0xf]
        %v790 = vld [vmem:[%s5 + $0x4] sm:$0xf]
        %v791 = vld [vmem:[%s5 + $0x8] sm:$0xf]
        %v792 = vld [vmem:[%s5 + $0xc] sm:$0xf]
        %v793 = vld [vmem:[%s5 + $0x10] sm:$0xf]
        %v794 = vld [vmem:[%s5 + $0x14] sm:$0xf]
        %v795 = vld [vmem:[%s5 + $0x18] sm:$0xf]
        %v796 = vld [vmem:[%s5 + $0x1c] sm:$0xf]
        %v797 = vld [vmem:[%s5 + $0x20] sm:$0xf]
        %v798 = vld [vmem:[%s5 + $0x24] sm:$0xf]
        %v799 = vld [vmem:[%s5 + $0x28] sm:$0xf]
        %v800 = vld [vmem:[%s5 + $0x2c] sm:$0xf]
        %v801 = vld [vmem:[%s5 + $0x30] sm:$0xf]
        %v802 = vld [vmem:[%s5 + $0x34] sm:$0xf]
        %v803 = vld [vmem:[%s5 + $0x38] sm:$0xf]
        %v804 = vld [vmem:[%s5 + $0x3c] sm:$0xf]
        %v821 = vunpack.c.l.b16 %v789
        %v822 = vunpack.c.l.b16 %v790
        %v823 = vunpack.c.l.b16 %v791
        %v824 = vunpack.c.l.b16 %v792
        %v825 = vunpack.c.l.b16 %v793
        %v826 = vunpack.c.l.b16 %v794
        %v827 = vunpack.c.l.b16 %v795
        %v828 = vunpack.c.l.b16 %v796
        %v829 = vunpack.c.l.b16 %v797
        %v830 = vunpack.c.l.b16 %v798
        %v831 = vunpack.c.l.b16 %v799
        %v832 = vunpack.c.l.b16 %v800
        %v833 = vunpack.c.l.b16 %v801
        %v834 = vunpack.c.l.b16 %v802
        %v835 = vunpack.c.l.b16 %v803
        %v836 = vunpack.c.l.b16 %v804
        %v837 = vpack.c.b16 %v822, %v821
        %v838 = vpack.c.b16 %v824, %v823
        %v839 = vpack.c.b16 %v826, %v825
        %v840 = vpack.c.b16 %v828, %v827
        %v841 = vpack.c.b16 %v830, %v829
        %v842 = vpack.c.b16 %v832, %v831
        %v843 = vpack.c.b16 %v834, %v833
        %v844 = vpack.c.b16 %v836, %v835
        %853 = vmatpush.bf16.msra.mxu0 %v844
        %854 = vmatpush.bf16.msra.mxu0 %v843
        %855 = vmatpush.bf16.msra.mxu0 %v842
        %856 = vmatpush.bf16.msra.mxu0 %v841
        %857 = vmatpush.bf16.msra.mxu0 %v840
        %858 = vmatpush.bf16.msra.mxu0 %v839
        %859 = vmatpush.bf16.msra.mxu0 %v838
        %860 = vmatpush.bf16.msra.mxu0 %v837
        %861 = vmatmul.bf16.gmra.mxu0 %v781
        %v862 = vpop.f32.mrf.mxu0
        %v863 = vadd.f32 0.0, %v862
        %v864 = vpop.f32.mrf.mxu0
        %v865 = vadd.f32 0.0, %v864
        %866 = vmatmul.bf16.gmra.mxu0 %v782
        %v867 = vpop.f32.mrf.mxu0
        %v868 = vadd.f32 0.0, %v867
        %v869 = vpop.f32.mrf.mxu0
        %v870 = vadd.f32 0.0, %v869
        %871 = vmatmul.bf16.gmra.mxu0 %v783
        %v872 = vpop.f32.mrf.mxu0
        %v873 = vadd.f32 0.0, %v872
        %v874 = vpop.f32.mrf.mxu0
        %v875 = vadd.f32 0.0, %v874
        %876 = vmatmul.bf16.gmra.mxu0 %v784
        %v877 = vpop.f32.mrf.mxu0
        %v878 = vadd.f32 0.0, %v877
        %v879 = vpop.f32.mrf.mxu0
        %v880 = vadd.f32 0.0, %v879
        %881 = vmatmul.bf16.gmra.mxu0 %v785
        %v882 = vpop.f32.mrf.mxu0
        %v883 = vadd.f32 0.0, %v882
        %v884 = vpop.f32.mrf.mxu0
        %v885 = vadd.f32 0.0, %v884
        %886 = vmatmul.bf16.gmra.mxu0 %v786
        %v887 = vpop.f32.mrf.mxu0
        %v888 = vadd.f32 0.0, %v887
        %v889 = vpop.f32.mrf.mxu0
        %v890 = vadd.f32 0.0, %v889
        %891 = vmatmul.bf16.gmra.mxu0 %v787
        %v892 = vpop.f32.mrf.mxu0
        %v893 = vadd.f32 0.0, %v892
        %v894 = vpop.f32.mrf.mxu0
        %v895 = vadd.f32 0.0, %v894
        %896 = vmatmul.bf16.gmra.mxu0 %v788
        %v897 = vpop.f32.mrf.mxu0
        %v898 = vadd.f32 0.0, %v897
        %v899 = vpop.f32.mrf.mxu0
        %v900 = vadd.f32 0.0, %v899
        %901 = vdwg.mxu0
        %v902 = vadd.f32 %v765, %v863
        %v903 = vadd.f32 %v766, %v865
        %v904 = vadd.f32 %v767, %v868
        %v905 = vadd.f32 %v768, %v870
        %v906 = vadd.f32 %v769, %v873
        %v907 = vadd.f32 %v770, %v875
        %v908 = vadd.f32 %v771, %v878
        %v909 = vadd.f32 %v772, %v880
        %v910 = vadd.f32 %v773, %v883
        %v911 = vadd.f32 %v774, %v885
        %v912 = vadd.f32 %v775, %v888
        %v913 = vadd.f32 %v776, %v890
        %v914 = vadd.f32 %v777, %v893
        %v915 = vadd.f32 %v778, %v895
        %v916 = vadd.f32 %v779, %v898
        %v917 = vadd.f32 %v780, %v900
        %918 = vst [vmem:[%s317] sm:$0xff] %v902
        %919 = vst [vmem:[%s317 + $0x8] sm:$0xff] %v903
        %920 = vst [vmem:[%s317 + $0x10] sm:$0xff] %v904
        %921 = vst [vmem:[%s317 + $0x18] sm:$0xff] %v905
        %922 = vst [vmem:[%s317 + $0x20] sm:$0xff] %v906
        %923 = vst [vmem:[%s317 + $0x28] sm:$0xff] %v907
        %924 = vst [vmem:[%s317 + $0x30] sm:$0xff] %v908
        %925 = vst [vmem:[%s317 + $0x38] sm:$0xff] %v909
        %926 = vst [vmem:[%s317 + $0x40] sm:$0xff] %v910
        %927 = vst [vmem:[%s317 + $0x48] sm:$0xff] %v911
        %928 = vst [vmem:[%s317 + $0x50] sm:$0xff] %v912
        %929 = vst [vmem:[%s317 + $0x58] sm:$0xff] %v913
        %930 = vst [vmem:[%s317 + $0x60] sm:$0xff] %v914
        %931 = vst [vmem:[%s317 + $0x68] sm:$0xff] %v915
        %932 = vst [vmem:[%s317 + $0x70] sm:$0xff] %v916
        %933 = vst [vmem:[%s317 + $0x78] sm:$0xff] %v917
      $region48: #{gcnii_layer_forward.1} parent=35 // pred_fallthru
        _
      %s934 = smul.u32 16, %s34
      %p935 = scmp.lt.s32.totalorder %s934, 31
      %s936 = scalar_select %p935, %s934, 31
      %s937 = smul.addr %s936, 8
      %s938 = scalar_lea.vmem %s6, %s937
      // Predicated region
      $region49: #{gcnii_layer_forward.1} parent=35 // pred_check
        %p939 = pneg %p169
      $region50: #{gcnii_layer_forward.1} parent=35 // pred_check_branch
        %941 = sbr.rel (%p939) target = $region52
      $region51: #{gcnii_layer_forward.1} parent=35 // pred_region
        %s942 = smul.u32 16, %s34
      $region52: #{gcnii_layer_forward.1} parent=35 // pred_fallthru
        _
    $region36: #{gcnii_layer_forward.1} parent=5 // pred_fallthru
      _
    %p943 = scmp.le.s32.totalorder 2, %s25
    // Predicated region
    $region53: #{gcnii_layer_forward.1} parent=5 // pred_check
      %p944 = pneg %p943
    $region54: #{gcnii_layer_forward.1} parent=5 // pred_check_branch
      %946 = sbr.rel (%p944) target = $region56
    $region55: #{gcnii_layer_forward.1} parent=5 // pred_region
      %s947 = ssub.s32 %s25, 2
      // Predicated region
      $region57: #{gcnii_layer_forward.1} parent=55 // pred_check
        %p948 = pneg %p175
      $region58: #{gcnii_layer_forward.1} parent=55 // pred_check_branch
        %950 = sbr.rel (%p948) target = $region60
      $region59: #{gcnii_layer_forward.1} parent=55 // pred_region
        %s951 = smul.u32 16, %s36
        %p952 = scmp.lt.s32.totalorder %s951, 31
        %s953 = scalar_select %p952, %s951, 31
        %s954 = smul.addr %s953, 8
        %s955 = scalar_lea.vmem %s6, %s954
      $region60: #{gcnii_layer_forward.1} parent=55 // pred_fallthru
        _
    $region56: #{gcnii_layer_forward.1} parent=5 // pred_fallthru
      _
  $region6: #{gcnii_layer_forward.1} parent=0 // loop_footer
    %s29 = sadd.s32 1, %s25
  $region7: #{gcnii_layer_forward.1} parent=0 // loop_footer_branch
    %24 = sbr.rel target = $region3
  $region8: #{gcnii_layer_forward.1} parent=0 // loop_exit
    _

</llo_original>
